<compile_context>
chip_gen: v7x
topology: tpu7x:2x2x1
jax: 0.10.0
libtpu: 0.0.40
codegen_flags: <defaults>
</compile_context>

<pallas_src>
import functools

import jax
import jax.numpy as jnp
from jax.experimental import pallas as pl
from jax.experimental.pallas import tpu as pltpu


def _round_up(x, m):
    return (x + m - 1) // m * m


def _pick_dst_tile(n_dst, n_src):
    """Largest 128-aligned dst tile whose [TM, N_src] working set fits VMEM."""
    if n_dst % 128 != 0:
        return n_dst  # tiny / odd graphs: single full block
    budget = 8 * 1024 * 1024  # adj(int8, double-buffered) + f32 temporaries
    for tm in (512, 256, 128):
        if n_dst % tm == 0 and tm * n_src * 16 <= budget:
            return tm
    return 128


def _block_diag_att(att):
    """[H, D] attention vector per head -> block-diagonal [H, H*D]."""
    h, d = att.shape
    eye = jnp.eye(h, dtype=att.dtype)
    return (eye[:, :, None] * att[None, :, :]).reshape(h, h * d)


# --------------------------------------------------------------------------
# Kernel 1: linear projection + per-head attention logits (tiled over nodes).
# --------------------------------------------------------------------------
def _gat_project_kernel(x_ref, w_ref, asrc_bd_ref, adst_bd_ref,
                        h_ref, asrc_t_ref, adst_ref):
    # All heads projected with one bf16 MXU matmul, f32 accumulation.
    x = x_ref[...].astype(jnp.bfloat16)                   # [TM, F_in]
    w = w_ref[...].astype(jnp.bfloat16)                   # [F_in, H*D]
    h = jnp.dot(x, w, preferred_element_type=jnp.float32)  # [TM, H*D] f32

    # Per-head attention logits via block-diagonal att params:
    #   asrc_t[h, m] = sum_d att_src[h, d] * h[m, h*D + d]   (already [H, TM])
    #   adst[m, h]   = sum_d att_dst[h, d] * h[m, h*D + d]
    contract = (((1,), (1,)), ((), ()))  # contract last dims of both operands
    asrc_t = jax.lax.dot_general(asrc_bd_ref[...], h, contract,
                                 preferred_element_type=jnp.float32)  # [H, TM]
    adst = jax.lax.dot_general(h, adst_bd_ref[...], contract,
                               preferred_element_type=jnp.float32)    # [TM, H]

    h_ref[...] = h.astype(h_ref.dtype)        # bf16 value table
    asrc_t_ref[...] = asrc_t
    adst_ref[...] = adst


# --------------------------------------------------------------------------
# Kernel 2: masked softmax attention + aggregation (tiled over dst blocks).
# --------------------------------------------------------------------------
def _gat_attn_kernel(adst_ref, asrc_t_ref, adj_ref, h_ref, bias_ref, o_ref, *,
                     heads, head_dim, negative_slope, concat, apply_elu,
                     out_dim, out_pad):
    # Adjacency mask bias computed once, shared by every head.
    adj = adj_ref[...].astype(jnp.float32)                # [TM, N] (int8 in HBM)
    mask_bias = jnp.where(adj > 0.0, 0.0, -1e30)          # [TM, N] f32

    h_all = h_ref[...]                                    # [N, H*D] bf16
    adst = adst_ref[...]                                  # [TM, H]  f32
    asrc_t = asrc_t_ref[...]                              # [H, N]   f32
    slope = jnp.float32(negative_slope)

    per_head = []
    acc = None
    for hd in range(heads):
        e = adst[:, hd:hd + 1] + asrc_t[hd:hd + 1, :]     # [TM, N]
        e = jnp.where(e > 0, e, slope * e)                # LeakyReLU
        e = e + mask_bias                                 # mask non-edges
        m = jnp.max(e, axis=-1, keepdims=True)
        p = jnp.exp(e - m)
        denom = jnp.sum(p, axis=-1, keepdims=True)
        attn = p * pl.reciprocal(denom, approx=True)      # softmax (EUP recip)
        h_hd = h_all[:, hd * head_dim:(hd + 1) * head_dim]  # [N, D] bf16
        out_h = jnp.dot(attn.astype(jnp.bfloat16), h_hd,
                        preferred_element_type=jnp.float32)  # [TM, D]
        if concat:
            per_head.append(out_h)
        else:
            acc = out_h if acc is None else acc + out_h

    if concat:
        pieces = per_head
    else:
        pieces = [acc * (1.0 / jnp.float32(heads))]
    if out_pad > out_dim:  # pad to lane-dense width; sliced off in the wrapper
        tm = pieces[0].shape[0]
        pieces.append(jnp.zeros((tm, out_pad - out_dim), jnp.float32))
    res = jnp.concatenate(pieces, axis=-1) if len(pieces) > 1 else pieces[0]

    res = res + bias_ref[...].astype(jnp.float32)         # [1, out_pad]
    if apply_elu:
        res = jnp.where(res > 0, res, jnp.exp(jnp.minimum(res, 0.0)) - 1.0)
    o_ref[...] = res.astype(o_ref.dtype)                  # one full-width store


# --------------------------------------------------------------------------
# Per-layer wrapper.
# --------------------------------------------------------------------------
def gat_conv(x, adj_i8, p, *, negative_slope, apply_elu):
    N, F_in = x.shape
    heads, head_dim, concat = p["heads"], p["head_dim"], p["concat"]
    hd_all = heads * head_dim
    out_dim = hd_all if concat else head_dim
    out_pad = _round_up(out_dim, 128)
    TM = _pick_dst_tile(N, N)
    n_blk = N // TM
    cparams = pltpu.CompilerParams(dimension_semantics=("parallel",),
                                   vmem_limit_bytes=32 * 1024 * 1024)

    # ---- projection + attention logits ----
    h_all, asrc_t, adst = pl.pallas_call(
        _gat_project_kernel,
        out_shape=(
            jax.ShapeDtypeStruct((N, hd_all), jnp.bfloat16),
            jax.ShapeDtypeStruct((heads, N), jnp.float32),
            jax.ShapeDtypeStruct((N, heads), jnp.float32),
        ),
        grid=(n_blk,),
        in_specs=[
            pl.BlockSpec((TM, F_in), lambda i: (i, 0)),
            pl.BlockSpec((F_in, hd_all), lambda i: (0, 0)),
            pl.BlockSpec((heads, hd_all), lambda i: (0, 0)),
            pl.BlockSpec((heads, hd_all), lambda i: (0, 0)),
        ],
        out_specs=(
            pl.BlockSpec((TM, hd_all), lambda i: (i, 0)),
            pl.BlockSpec((heads, TM), lambda i: (0, i)),
            pl.BlockSpec((TM, heads), lambda i: (i, 0)),
        ),
        compiler_params=cparams,
    )(x, p["w"], p["att_src_bd"], p["att_dst_bd"])

    bias_pad = jnp.pad(p["bias"], ((0, 0), (0, out_pad - out_dim)))

    attn_kernel = functools.partial(
        _gat_attn_kernel, heads=heads, head_dim=head_dim,
        negative_slope=negative_slope, concat=concat, apply_elu=apply_elu,
        out_dim=out_dim, out_pad=out_pad)

    # ---- masked softmax + aggregation, tiled over destination blocks ----
    out = pl.pallas_call(
        attn_kernel,
        out_shape=jax.ShapeDtypeStruct((N, out_pad), x.dtype),
        grid=(n_blk,),
        in_specs=[
            pl.BlockSpec((TM, heads), lambda i: (i, 0)),
            pl.BlockSpec((heads, N), lambda i: (0, 0)),
            pl.BlockSpec((TM, N), lambda i: (i, 0)),
            pl.BlockSpec((N, hd_all), lambda i: (0, 0)),
            pl.BlockSpec((1, out_pad), lambda i: (0, 0)),
        ],
        out_specs=pl.BlockSpec((TM, out_pad), lambda i: (i, 0)),
        compiler_params=cparams,
    )(adst, asrc_t, adj_i8, h_all, bias_pad)

    return out[:, :out_dim]


# --------------------------------------------------------------------------
# Parameter init mirroring GAT.__init__ shape bookkeeping.
# --------------------------------------------------------------------------
def init_gat_params(key, layers, n_features, n_classes, head_dims, heads):
    in_shapes = [n_features] + [head_dims * heads] * (layers - 1)
    out_shapes = [head_dims] * (layers - 1) + [n_classes]
    head_shape = [heads] * (layers - 1) + [1]
    params = []
    for l in range(layers):
        key, kw, ks, kd = jax.random.split(key, 4)
        fan_in, d_out, h = in_shapes[l], out_shapes[l], head_shape[l]
        concat = (l != layers - 1)
        w = jax.random.uniform(kw, (fan_in, h * d_out), jnp.float32, -1.0, 1.0)
        w = w * jnp.sqrt(6.0 / (fan_in + h * d_out))          # glorot
        att_src = jax.random.uniform(ks, (h, d_out), jnp.float32, -1.0, 1.0)
        att_src = att_src * jnp.sqrt(6.0 / (1.0 + d_out))
        att_dst = jax.random.uniform(kd, (h, d_out), jnp.float32, -1.0, 1.0)
        att_dst = att_dst * jnp.sqrt(6.0 / (1.0 + d_out))
        out_dim = h * d_out if concat else d_out
        bias = jnp.zeros((1, out_dim), jnp.float32)
        params.append(dict(
            w=w, bias=bias,
            att_src_bd=_block_diag_att(att_src),
            att_dst_bd=_block_diag_att(att_dst),
            heads=h, head_dim=d_out, concat=concat))
    return params


def gat_forward(x, adj, params, negative_slope=0.2):
    # eval mode: F.dropout(x, training=False) is the identity.
    adj_i8 = (adj > 0).astype(jnp.int8)
    n_layers = len(params)
    for l, p in enumerate(params):
        x = gat_conv(x, adj_i8, p, negative_slope=negative_slope,
                     apply_elu=(l != n_layers - 1))
    return x


if __name__ == "__main__":
    key = jax.random.PRNGKey(0)
    kx, ka, kp = jax.random.split(key, 3)

    # Small, module-consistent config.
    layers, n_features, n_classes = 2, 32, 8
    head_dims, heads = 16, 4
    N = 128  # nodes

    x = jax.random.normal(kx, (N, n_features), jnp.float32)
    # Random sparse directed graph as dense adjacency + self loops (PyG
    # GATConv adds self loops, which also guards against empty softmax rows).
    adj = (jax.random.uniform(ka, (N, N)) < 0.1).astype(jnp.float32)
    adj = jnp.maximum(adj, jnp.eye(N, dtype=jnp.float32))

    params = init_gat_params(kp, layers, n_features, n_classes, head_dims, heads)

    out = gat_forward(x, adj, params, negative_slope=0.2)
    out = jax.block_until_ready(out)
    assert out.shape == (N, n_classes), out.shape
    print("KERNEL_OK")
</pallas_src>

<mosaic_0001>
module attributes {stable_mosaic.version = 11 : i64} {
  func.func @_gat_project_kernel(%arg0: i32, %arg1: memref<128x32xf32, #tpu.memory_space<vmem>>, %arg2: memref<32x64xf32, #tpu.memory_space<vmem>>, %arg3: memref<4x64xf32, #tpu.memory_space<vmem>>, %arg4: memref<4x64xf32, #tpu.memory_space<vmem>>, %arg5: memref<128x64xbf16, #tpu.memory_space<vmem>>, %arg6: memref<4x128xf32, #tpu.memory_space<vmem>>, %arg7: memref<128x4xf32, #tpu.memory_space<vmem>>) attributes {dimension_semantics = [#tpu.dimension_semantics<parallel>], iteration_bounds = array<i64: 1>, scalar_prefetch = 0 : i64, scratch_operands = 0 : i64, tpu.core_type = #tpu.core_type<tc>, window_params = [{transform_indices = @transform_0, window_bounds = array<i64: 128, 32>}, {pipeline_mode = #tpu.pipeline_mode<synchronous>, transform_indices = @transform_1, window_bounds = array<i64: 32, 64>}, {pipeline_mode = #tpu.pipeline_mode<synchronous>, transform_indices = @transform_2, window_bounds = array<i64: 4, 64>}, {pipeline_mode = #tpu.pipeline_mode<synchronous>, transform_indices = @transform_3, window_bounds = array<i64: 4, 64>}, {transform_indices = @transform_4, window_bounds = array<i64: 128, 64>}, {transform_indices = @transform_5, window_bounds = array<i64: 4, 128>}, {transform_indices = @transform_6, window_bounds = array<i64: 128, 4>}]} {
    %c0 = arith.constant 0 : index
    %c0_0 = arith.constant 0 : index
    %0 = vector.load %arg1[%c0, %c0_0] : memref<128x32xf32, #tpu.memory_space<vmem>>, vector<128x32xf32>
    %1 = arith.truncf %0 : vector<128x32xf32> to vector<128x32xbf16>
    %c0_1 = arith.constant 0 : index
    %c0_2 = arith.constant 0 : index
    %2 = vector.load %arg2[%c0_1, %c0_2] : memref<32x64xf32, #tpu.memory_space<vmem>>, vector<32x64xf32>
    %3 = arith.truncf %2 : vector<32x64xf32> to vector<32x64xbf16>
    %cst = arith.constant dense<0.000000e+00> : vector<128x64xf32>
    %4 = tpu.matmul %1, %3, %cst {dimension_numbers = #tpu.dot_dimension_numbers<[1], [0], [0], [1], [0, 0, 1, 1], [], []>} : vector<128x32xbf16>, vector<32x64xbf16>, vector<128x64xf32> -> vector<128x64xf32>
    %c0_3 = arith.constant 0 : index
    %c0_4 = arith.constant 0 : index
    %5 = vector.load %arg3[%c0_3, %c0_4] : memref<4x64xf32, #tpu.memory_space<vmem>>, vector<4x64xf32>
    %cst_5 = arith.constant dense<0.000000e+00> : vector<4x128xf32>
    %6 = tpu.matmul %5, %4, %cst_5 {dimension_numbers = #tpu.dot_dimension_numbers<[1], [1], [0], [0], [0, 0, 1, 0], [], []>} : vector<4x64xf32>, vector<128x64xf32>, vector<4x128xf32> -> vector<4x128xf32>
    %c0_6 = arith.constant 0 : index
    %c0_7 = arith.constant 0 : index
    %7 = vector.load %arg4[%c0_6, %c0_7] : memref<4x64xf32, #tpu.memory_space<vmem>>, vector<4x64xf32>
    %cst_8 = arith.constant dense<0.000000e+00> : vector<128x4xf32>
    %8 = tpu.matmul %4, %7, %cst_8 {dimension_numbers = #tpu.dot_dimension_numbers<[1], [1], [0], [0], [0, 0, 1, 0], [], []>} : vector<128x64xf32>, vector<4x64xf32>, vector<128x4xf32> -> vector<128x4xf32>
    %9 = arith.truncf %4 : vector<128x64xf32> to vector<128x64xbf16>
    %c0_9 = arith.constant 0 : index
    %c0_10 = arith.constant 0 : index
    %10 = vector.load %arg5[%c0_9, %c0_10] : memref<128x64xbf16, #tpu.memory_space<vmem>>, vector<128x64xbf16>
    tpu.vector_store %arg5[%c0_9, %c0_10], %9 {strides = array<i32>} : memref<128x64xbf16, #tpu.memory_space<vmem>>, vector<128x64xbf16>,
    %c0_11 = arith.constant 0 : index
    %c0_12 = arith.constant 0 : index
    %11 = vector.load %arg6[%c0_11, %c0_12] : memref<4x128xf32, #tpu.memory_space<vmem>>, vector<4x128xf32>
    tpu.vector_store %arg6[%c0_11, %c0_12], %6 {strides = array<i32>} : memref<4x128xf32, #tpu.memory_space<vmem>>, vector<4x128xf32>,
    %c0_13 = arith.constant 0 : index
    %c0_14 = arith.constant 0 : index
    %12 = vector.load %arg7[%c0_13, %c0_14] : memref<128x4xf32, #tpu.memory_space<vmem>>, vector<128x4xf32>
    tpu.vector_store %arg7[%c0_13, %c0_14], %8 {strides = array<i32>} : memref<128x4xf32, #tpu.memory_space<vmem>>, vector<128x4xf32>,
    return
  }
  func.func @transform_0(%arg0: i32) -> (i32, i32) {
    %c0_i32 = arith.constant 0 : i32
    %c0_i32_0 = arith.constant 0 : i32
    return %arg0, %c0_i32 : i32, i32
  }
  func.func @transform_1(%arg0: i32) -> (i32, i32) {
    %c0_i32 = arith.constant 0 : i32
    %c0_i32_0 = arith.constant 0 : i32
    %c0_i32_1 = arith.constant 0 : i32
    return %c0_i32, %c0_i32_0 : i32, i32
  }
  func.func @transform_2(%arg0: i32) -> (i32, i32) {
    %c0_i32 = arith.constant 0 : i32
    %c0_i32_0 = arith.constant 0 : i32
    %c0_i32_1 = arith.constant 0 : i32
    return %c0_i32, %c0_i32_0 : i32, i32
  }
  func.func @transform_3(%arg0: i32) -> (i32, i32) {
    %c0_i32 = arith.constant 0 : i32
    %c0_i32_0 = arith.constant 0 : i32
    %c0_i32_1 = arith.constant 0 : i32
    return %c0_i32, %c0_i32_0 : i32, i32
  }
  func.func @transform_4(%arg0: i32) -> (i32, i32) {
    %c0_i32 = arith.constant 0 : i32
    %c0_i32_0 = arith.constant 0 : i32
    return %arg0, %c0_i32 : i32, i32
  }
  func.func @transform_5(%arg0: i32) -> (i32, i32) {
    %c0_i32 = arith.constant 0 : i32
    %c0_i32_0 = arith.constant 0 : i32
    return %c0_i32, %arg0 : i32, i32
  }
  func.func @transform_6(%arg0: i32) -> (i32, i32) {
    %c0_i32 = arith.constant 0 : i32
    %c0_i32_0 = arith.constant 0 : i32
    return %arg0, %c0_i32 : i32, i32
  }
}

</mosaic_0001>

<llo_original>
// kernel: tpu_custom_call.1
$region0: #{tpu_custom_call.1}
  #allocation0 [shape = 'u32[]', space=smem, size = 0x4, offset = 0x4, fixed_abs, tag = 'smem constant byte address 0x4 - core index']
  #allocation1 [shape = 'u32[144,128]{1,0:T(1,128)}', space=vmem, size = 0x12000, scoped, tag = 'internal scratch']
  %s0 = inlined_call_operand.vmem [shape: f32[128,32], index: 0, kind: input, shape index: {}]
  %s1 = inlined_call_operand.vmem [shape: f32[32,64], index: 1, kind: input, shape index: {}]
  %s2 = inlined_call_operand.vmem [shape: f32[4,64], index: 2, kind: input, shape index: {}]
  %s3 = inlined_call_operand.vmem [shape: f32[4,64], index: 3, kind: input, shape index: {}]
  %s4 = inlined_call_operand.vmem [shape: bf16[128,64], index: 4, kind: output, shape index: {0}]
  %s5 = inlined_call_operand.hbm [shape: f32[4,128], index: 5, kind: output, shape index: {1}]
  %s6 = inlined_call_operand.vmem [shape: f32[128,4], index: 6, kind: output, shape index: {2}]
  %7 = xla_tuple %s4, %s5, %s6
  %s8 = sld [smem:[#allocation0]]
  $region42: #{tpu_custom_call.1} parent=0
    _
  %s10 = ssub.s32 1, %s8
  %s11 = scalar_select 0, %s10, %s8
  $region1: #{tpu_custom_call.1} parent=0
    #allocation2 [shape = 'u8[2048]{0}', space=vmem, size = 0x800, scoped, tag = 'output window, operand 1, single buffered']
    #allocation3 [shape = 's32[1]{0}', space=sflag, size = 0x4, scoped, tag = 'scoped memory for tpu_custom_call.1']
    %12 = vsyncpa [#allocation3], 0
    // Predicated region
    $region2: #{tpu_custom_call.1} parent=1 // pred_check
      _
    $region3: #{tpu_custom_call.1} parent=1 // pred_check_branch
      %14 = sbr.rel (0) target = $region5
    $region4: #{tpu_custom_call.1} parent=1 // pred_region
      _
    $region5: #{tpu_custom_call.1} parent=1 // pred_fallthru
      _
    // Predicated region
    $region6: #{tpu_custom_call.1} parent=1 // pred_check
      _
    $region7: #{tpu_custom_call.1} parent=1 // pred_check_branch
      %16 = sbr.rel (0) target = $region9
    $region8: #{tpu_custom_call.1} parent=1 // pred_region
      _
    $region9: #{tpu_custom_call.1} parent=1 // pred_fallthru
      _
    // Predicated region
    $region10: #{tpu_custom_call.1} parent=1 // pred_check
      _
    $region11: #{tpu_custom_call.1} parent=1 // pred_check_branch
      %18 = sbr.rel (0) target = $region13
    $region12: #{tpu_custom_call.1} parent=1 // pred_region
      _
    $region13: #{tpu_custom_call.1} parent=1 // pred_fallthru
      _
    // Predicated region
    $region14: #{tpu_custom_call.1} parent=1 // pred_check
      _
    $region15: #{tpu_custom_call.1} parent=1 // pred_check_branch
      %20 = sbr.rel (0) target = $region17
    $region16: #{tpu_custom_call.1} parent=1 // pred_region
      _
    $region17: #{tpu_custom_call.1} parent=1 // pred_fallthru
      _
    %v22 = vld [vmem:[%s0] sm:$0xff]
    %v23 = vld [vmem:[%s0 + $0x8] sm:$0xff]
    %v24 = vld [vmem:[%s0 + $0x10] sm:$0xff]
    %v25 = vld [vmem:[%s0 + $0x18] sm:$0xff]
    %v26 = vld [vmem:[%s0 + $0x20] sm:$0xff]
    %v27 = vld [vmem:[%s0 + $0x28] sm:$0xff]
    %v28 = vld [vmem:[%s0 + $0x30] sm:$0xff]
    %v29 = vld [vmem:[%s0 + $0x38] sm:$0xff]
    %v30 = vld [vmem:[%s0 + $0x40] sm:$0xff]
    %v31 = vld [vmem:[%s0 + $0x48] sm:$0xff]
    %v32 = vld [vmem:[%s0 + $0x50] sm:$0xff]
    %v33 = vld [vmem:[%s0 + $0x58] sm:$0xff]
    %v34 = vld [vmem:[%s0 + $0x60] sm:$0xff]
    %v35 = vld [vmem:[%s0 + $0x68] sm:$0xff]
    %v36 = vld [vmem:[%s0 + $0x70] sm:$0xff]
    %v37 = vld [vmem:[%s0 + $0x78] sm:$0xff]
    %v38 = vpack.c.bf16 %v23, %v22
    %v39 = vpack.c.bf16 %v25, %v24
    %v40 = vpack.c.bf16 %v27, %v26
    %v41 = vpack.c.bf16 %v29, %v28
    %v42 = vpack.c.bf16 %v31, %v30
    %v43 = vpack.c.bf16 %v33, %v32
    %v44 = vpack.c.bf16 %v35, %v34
    %v45 = vpack.c.bf16 %v37, %v36
    %v46 = vld [vmem:[%s1] sm:$0xff]
    %v47 = vld [vmem:[%s1 + $0x8] sm:$0xff]
    %v48 = vld [vmem:[%s1 + $0x10] sm:$0xff]
    %v49 = vld [vmem:[%s1 + $0x18] sm:$0xff]
    %v50 = vpack.c.bf16 %v47, %v46
    %v51 = vpack.c.bf16 %v49, %v48
    %vm52 = vcmask 261120
    %v54 = vsel %vm52, %v38, 0
    %v57 = vsel %vm52, %v39, 0
    %v60 = vsel %vm52, %v40, 0
    %v63 = vsel %vm52, %v41, 0
    %v66 = vsel %vm52, %v42, 0
    %v69 = vsel %vm52, %v43, 0
    %v72 = vsel %vm52, %v44, 0
    %v75 = vsel %vm52, %v45, 0
    %77 = vmatprep.subr.bf16.mxu0 0
    %78 = vmatpush1.bf16.msra.mxu0 %v50
    %79 = vmatprep.subr.bf16.mxu0 0
    %80 = vmatpush1.bf16.msra.mxu0 %v51
    %81 = vmatprep.subr.bf16.mxu0 0
    %82 = vmatpush1.bf16.msra.mxu0 0
    %83 = vmatprep.subr.bf16.mxu0 0
    %84 = vmatpush1.bf16.msra.mxu0 0
    %85 = vmatprep.subr.bf16.mxu0 0
    %86 = vmatpush1.bf16.msra.mxu0 0
    %87 = vmatprep.subr.bf16.mxu0 0
    %88 = vmatpush1.bf16.msra.mxu0 0
    %89 = vmatprep.subr.bf16.mxu0 0
    %90 = vmatpush1.bf16.msra.mxu0 0
    %91 = vmatprep.subr.bf16.mxu0 0
    %92 = vmatpush1.bf16.msra.mxu0 0
    %93 = vmatprep.subr.bf16.mxu0 0
    %94 = vmatpush1.bf16.msra.mxu0 0
    %95 = vmatprep.subr.bf16.mxu0 0
    %96 = vmatpush1.bf16.msra.mxu0 0
    %97 = vmatprep.subr.bf16.mxu0 0
    %98 = vmatpush1.bf16.msra.mxu0 0
    %99 = vmatprep.subr.bf16.mxu0 0
    %100 = vmatpush1.bf16.msra.mxu0 0
    %101 = vmatprep.subr.bf16.mxu0 0
    %102 = vmatpush1.bf16.msra.mxu0 0
    %103 = vmatprep.subr.bf16.mxu0 0
    %104 = vmatpush1.bf16.msra.mxu0 0
    %105 = vmatprep.subr.bf16.mxu0 0
    %106 = vmatpush1.bf16.msra.mxu0 0
    %107 = vmatprep.subr.bf16.mxu0 0
    %108 = vmatpush1.bf16.msra.mxu0 0
    %109 = vmatprep.mubr.bf16.mxu0 0
    %110 = vmatmul.mubr.bf16.gmra.mrb[0].mxu0 %v54
    %v111 = vpop.f32.mrb[0].mxu0
    %v112 = vadd.f32 0.0, %v111
    %v113 = vpop.f32.mrb[0].mxu0
    %v114 = vpop.f32.mrb[0].mxu0
    %v115 = vadd.f32 0.0, %v114
    %v116 = vpop.f32.mrb[0].mxu0
    %117 = vmatprep.mubr.bf16.mxu0 0
    %118 = vmatmul.mubr.bf16.gmra.mrb[0].mxu0 %v57
    %v119 = vpop.f32.mrb[0].mxu0
    %v120 = vadd.f32 0.0, %v119
    %v121 = vpop.f32.mrb[0].mxu0
    %v122 = vpop.f32.mrb[0].mxu0
    %v123 = vadd.f32 0.0, %v122
    %v124 = vpop.f32.mrb[0].mxu0
    %125 = vmatprep.mubr.bf16.mxu0 0
    %126 = vmatmul.mubr.bf16.gmra.mrb[0].mxu0 %v60
    %v127 = vpop.f32.mrb[0].mxu0
    %v128 = vadd.f32 0.0, %v127
    %v129 = vpop.f32.mrb[0].mxu0
    %v130 = vpop.f32.mrb[0].mxu0
    %v131 = vadd.f32 0.0, %v130
    %v132 = vpop.f32.mrb[0].mxu0
    %133 = vmatprep.mubr.bf16.mxu0 0
    %134 = vmatmul.mubr.bf16.gmra.mrb[0].mxu0 %v63
    %v135 = vpop.f32.mrb[0].mxu0
    %v136 = vadd.f32 0.0, %v135
    %v137 = vpop.f32.mrb[0].mxu0
    %v138 = vpop.f32.mrb[0].mxu0
    %v139 = vadd.f32 0.0, %v138
    %v140 = vpop.f32.mrb[0].mxu0
    %141 = vmatprep.mubr.bf16.mxu0 0
    %142 = vmatmul.mubr.bf16.gmra.mrb[0].mxu0 %v66
    %v143 = vpop.f32.mrb[0].mxu0
    %v144 = vadd.f32 0.0, %v143
    %v145 = vpop.f32.mrb[0].mxu0
    %v146 = vpop.f32.mrb[0].mxu0
    %v147 = vadd.f32 0.0, %v146
    %v148 = vpop.f32.mrb[0].mxu0
    %149 = vmatprep.mubr.bf16.mxu0 0
    %150 = vmatmul.mubr.bf16.gmra.mrb[0].mxu0 %v69
    %v151 = vpop.f32.mrb[0].mxu0
    %v152 = vadd.f32 0.0, %v151
    %v153 = vpop.f32.mrb[0].mxu0
    %v154 = vpop.f32.mrb[0].mxu0
    %v155 = vadd.f32 0.0, %v154
    %v156 = vpop.f32.mrb[0].mxu0
    %157 = vmatprep.mubr.bf16.mxu0 0
    %158 = vmatmul.mubr.bf16.gmra.mrb[0].mxu0 %v72
    %v159 = vpop.f32.mrb[0].mxu0
    %v160 = vadd.f32 0.0, %v159
    %v161 = vpop.f32.mrb[0].mxu0
    %v162 = vpop.f32.mrb[0].mxu0
    %v163 = vadd.f32 0.0, %v162
    %v164 = vpop.f32.mrb[0].mxu0
    %165 = vmatprep.mubr.bf16.mxu0 0
    %166 = vmatmul.mubr.bf16.gmra.mrb[0].mxu0 %v75
    %v167 = vpop.f32.mrb[0].mxu0
    %v168 = vadd.f32 0.0, %v167
    %v169 = vpop.f32.mrb[0].mxu0
    %v170 = vpop.f32.mrb[0].mxu0
    %v171 = vadd.f32 0.0, %v170
    %v172 = vpop.f32.mrb[0].mxu0
    %173 = vdwg.mxu0
    %v174 = vld [vmem:[%s2] sm:$0xf]
    %vm175 = vcmask 523264
    %v177 = vsel %vm175, %v174, 0
    %v180 = vsel %vm175, %v112, 0
    %v183 = vsel %vm175, %v115, 0
    %v186 = vsel %vm175, %v120, 0
    %v189 = vsel %vm175, %v123, 0
    %v192 = vsel %vm175, %v128, 0
    %v195 = vsel %vm175, %v131, 0
    %v198 = vsel %vm175, %v136, 0
    %v201 = vsel %vm175, %v139, 0
    %v204 = vsel %vm175, %v144, 0
    %v207 = vsel %vm175, %v147, 0
    %v210 = vsel %vm175, %v152, 0
    %v213 = vsel %vm175, %v155, 0
    %v216 = vsel %vm175, %v160, 0
    %v219 = vsel %vm175, %v163, 0
    %v222 = vsel %vm175, %v168, 0
    %v225 = vsel %vm175, %v171, 0
    %227 = vmatprep.subr.mxu0 0.0
    %228 = vmatpush1.xpose.msra.mxu0 %v180
    %229 = vmatprep.subr.mxu0 0.0
    %230 = vmatpush1.xpose.msra.mxu0 %v183
    %231 = vmatprep.subr.mxu0 0.0
    %232 = vmatpush1.xpose.msra.mxu0 %v186
    %233 = vmatprep.subr.mxu0 0.0
    %234 = vmatpush1.xpose.msra.mxu0 %v189
    %235 = vmatprep.subr.mxu0 0.0
    %236 = vmatpush1.xpose.msra.mxu0 %v192
    %237 = vmatprep.subr.mxu0 0.0
    %238 = vmatpush1.xpose.msra.mxu0 %v195
    %239 = vmatprep.subr.mxu0 0.0
    %240 = vmatpush1.xpose.msra.mxu0 %v198
    %241 = vmatprep.subr.mxu0 0.0
    %242 = vmatpush1.xpose.msra.mxu0 %v201
    %243 = vmatprep.subr.mxu0 0.0
    %244 = vmatpush1.xpose.msra.mxu0 %v204
    %245 = vmatprep.subr.mxu0 0.0
    %246 = vmatpush1.xpose.msra.mxu0 %v207
    %247 = vmatprep.subr.mxu0 0.0
    %248 = vmatpush1.xpose.msra.mxu0 %v210
    %249 = vmatprep.subr.mxu0 0.0
    %250 = vmatpush1.xpose.msra.mxu0 %v213
    %251 = vmatprep.subr.mxu0 0.0
    %252 = vmatpush1.xpose.msra.mxu0 %v216
    %253 = vmatprep.subr.mxu0 0.0
    %254 = vmatpush1.xpose.msra.mxu0 %v219
    %255 = vmatprep.subr.mxu0 0.0
    %256 = vmatpush1.xpose.msra.mxu0 %v222
    %257 = vmatprep.subr.mxu0 0.0
    %258 = vmatpush1.xpose.msra.mxu0 %v225
    %259 = vmatprep.subr.mxu0 0.0
    %260 = vmatpush1.xpose.msra.mxu0 0.0
    %261 = vmatprep.subr.mxu0 0.0
    %262 = vmatpush1.xpose.msra.mxu0 0.0
    %263 = vmatprep.subr.mxu0 0.0
    %264 = vmatpush1.xpose.msra.mxu0 0.0
    %265 = vmatprep.subr.mxu0 0.0
    %266 = vmatpush1.xpose.msra.mxu0 0.0
    %267 = vmatprep.subr.mxu0 0.0
    %268 = vmatpush1.xpose.msra.mxu0 0.0
    %269 = vmatprep.subr.mxu0 0.0
    %270 = vmatpush1.xpose.msra.mxu0 0.0
    %271 = vmatprep.subr.mxu0 0.0
    %272 = vmatpush1.xpose.msra.mxu0 0.0
    %273 = vmatprep.subr.mxu0 0.0
    %274 = vmatpush1.xpose.msra.mxu0 0.0
    %275 = vmatprep.subr.mxu0 0.0
    %276 = vmatpush1.xpose.msra.mxu0 0.0
    %277 = vmatprep.subr.mxu0 0.0
    %278 = vmatpush1.xpose.msra.mxu0 0.0
    %279 = vmatprep.subr.mxu0 0.0
    %280 = vmatpush1.xpose.msra.mxu0 0.0
    %281 = vmatprep.subr.mxu0 0.0
    %282 = vmatpush1.xpose.msra.mxu0 0.0
    %283 = vmatprep.subr.mxu0 0.0
    %284 = vmatpush1.xpose.msra.mxu0 0.0
    %285 = vmatprep.subr.mxu0 0.0
    %286 = vmatpush1.xpose.msra.mxu0 0.0
    %287 = vmatprep.subr.mxu0 0.0
    %288 = vmatpush1.xpose.msra.mxu0 0.0
    %289 = vmatprep.subr.mxu0 0.0
    %290 = vmatpush1.xpose.msra.mxu0 0.0
    %291 = vmatprep.mubr.f32.mxu0 0.0
    %292 = vmatmul.mubr.f32.gmra.mrb[0].mxu0 %v177
    %v293 = vpop.f32.mrb[0].mxu0
    %v294 = vadd.f32 0.0, %v293
    %v295 = vpop.f32.mrb[0].mxu0
    %296 = vdwg.mxu0
    %v297 = vld [vmem:[%s3] sm:$0xf]
    %v299 = vsel %vm175, %v297, 0
    %301 = vmatprep.subr.mxu0 0.0
    %302 = vmatpush1.xpose.msra.mxu0 %v299
    %303 = vmatprep.subr.mxu0 0.0
    %304 = vmatpush1.xpose.msra.mxu0 0.0
    %305 = vmatprep.subr.mxu0 0.0
    %306 = vmatpush1.xpose.msra.mxu0 0.0
    %307 = vmatprep.subr.mxu0 0.0
    %308 = vmatpush1.xpose.msra.mxu0 0.0
    %309 = vmatprep.subr.mxu0 0.0
    %310 = vmatpush1.xpose.msra.mxu0 0.0
    %311 = vmatprep.subr.mxu0 0.0
    %312 = vmatpush1.xpose.msra.mxu0 0.0
    %313 = vmatprep.subr.mxu0 0.0
    %314 = vmatpush1.xpose.msra.mxu0 0.0
    %315 = vmatprep.subr.mxu0 0.0
    %316 = vmatpush1.xpose.msra.mxu0 0.0
    %317 = vmatprep.subr.mxu0 0.0
    %318 = vmatpush1.xpose.msra.mxu0 0.0
    %319 = vmatprep.subr.mxu0 0.0
    %320 = vmatpush1.xpose.msra.mxu0 0.0
    %321 = vmatprep.subr.mxu0 0.0
    %322 = vmatpush1.xpose.msra.mxu0 0.0
    %323 = vmatprep.subr.mxu0 0.0
    %324 = vmatpush1.xpose.msra.mxu0 0.0
    %325 = vmatprep.subr.mxu0 0.0
    %326 = vmatpush1.xpose.msra.mxu0 0.0
    %327 = vmatprep.subr.mxu0 0.0
    %328 = vmatpush1.xpose.msra.mxu0 0.0
    %329 = vmatprep.subr.mxu0 0.0
    %330 = vmatpush1.xpose.msra.mxu0 0.0
    %331 = vmatprep.subr.mxu0 0.0
    %332 = vmatpush1.xpose.msra.mxu0 0.0
    %333 = vmatprep.subr.mxu0 0.0
    %334 = vmatpush1.xpose.msra.mxu0 0.0
    %335 = vmatprep.subr.mxu0 0.0
    %336 = vmatpush1.xpose.msra.mxu0 0.0
    %337 = vmatprep.subr.mxu0 0.0
    %338 = vmatpush1.xpose.msra.mxu0 0.0
    %339 = vmatprep.subr.mxu0 0.0
    %340 = vmatpush1.xpose.msra.mxu0 0.0
    %341 = vmatprep.subr.mxu0 0.0
    %342 = vmatpush1.xpose.msra.mxu0 0.0
    %343 = vmatprep.subr.mxu0 0.0
    %344 = vmatpush1.xpose.msra.mxu0 0.0
    %345 = vmatprep.subr.mxu0 0.0
    %346 = vmatpush1.xpose.msra.mxu0 0.0
    %347 = vmatprep.subr.mxu0 0.0
    %348 = vmatpush1.xpose.msra.mxu0 0.0
    %349 = vmatprep.subr.mxu0 0.0
    %350 = vmatpush1.xpose.msra.mxu0 0.0
    %351 = vmatprep.subr.mxu0 0.0
    %352 = vmatpush1.xpose.msra.mxu0 0.0
    %353 = vmatprep.subr.mxu0 0.0
    %354 = vmatpush1.xpose.msra.mxu0 0.0
    %355 = vmatprep.subr.mxu0 0.0
    %356 = vmatpush1.xpose.msra.mxu0 0.0
    %357 = vmatprep.subr.mxu0 0.0
    %358 = vmatpush1.xpose.msra.mxu0 0.0
    %359 = vmatprep.subr.mxu0 0.0
    %360 = vmatpush1.xpose.msra.mxu0 0.0
    %361 = vmatprep.subr.mxu0 0.0
    %362 = vmatpush1.xpose.msra.mxu0 0.0
    %363 = vmatprep.subr.mxu0 0.0
    %364 = vmatpush1.xpose.msra.mxu0 0.0
    %365 = vmatprep.mubr.f32.mxu0 0.0
    %366 = vmatmul.mubr.f32.gmra.mrb[0].mxu0 %v180
    %v367 = vpop.f32.mrb[0].mxu0
    %v368 = vadd.f32 0.0, %v367
    %v369 = vpop.f32.mrb[0].mxu0
    %370 = vmatprep.mubr.f32.mxu0 0.0
    %371 = vmatmul.mubr.f32.gmra.mrb[0].mxu0 %v183
    %v372 = vpop.f32.mrb[0].mxu0
    %v373 = vadd.f32 0.0, %v372
    %v374 = vpop.f32.mrb[0].mxu0
    %375 = vmatprep.mubr.f32.mxu0 0.0
    %376 = vmatmul.mubr.f32.gmra.mrb[0].mxu0 %v186
    %v377 = vpop.f32.mrb[0].mxu0
    %v378 = vadd.f32 0.0, %v377
    %v379 = vpop.f32.mrb[0].mxu0
    %380 = vmatprep.mubr.f32.mxu0 0.0
    %381 = vmatmul.mubr.f32.gmra.mrb[0].mxu0 %v189
    %v382 = vpop.f32.mrb[0].mxu0
    %v383 = vadd.f32 0.0, %v382
    %v384 = vpop.f32.mrb[0].mxu0
    %385 = vmatprep.mubr.f32.mxu0 0.0
    %386 = vmatmul.mubr.f32.gmra.mrb[0].mxu0 %v192
    %v387 = vpop.f32.mrb[0].mxu0
    %v388 = vadd.f32 0.0, %v387
    %v389 = vpop.f32.mrb[0].mxu0
    %390 = vmatprep.mubr.f32.mxu0 0.0
    %391 = vmatmul.mubr.f32.gmra.mrb[0].mxu0 %v195
    %v392 = vpop.f32.mrb[0].mxu0
    %v393 = vadd.f32 0.0, %v392
    %v394 = vpop.f32.mrb[0].mxu0
    %395 = vmatprep.mubr.f32.mxu0 0.0
    %396 = vmatmul.mubr.f32.gmra.mrb[0].mxu0 %v198
    %v397 = vpop.f32.mrb[0].mxu0
    %v398 = vadd.f32 0.0, %v397
    %v399 = vpop.f32.mrb[0].mxu0
    %400 = vmatprep.mubr.f32.mxu0 0.0
    %401 = vmatmul.mubr.f32.gmra.mrb[0].mxu0 %v201
    %v402 = vpop.f32.mrb[0].mxu0
    %v403 = vadd.f32 0.0, %v402
    %v404 = vpop.f32.mrb[0].mxu0
    %405 = vmatprep.mubr.f32.mxu0 0.0
    %406 = vmatmul.mubr.f32.gmra.mrb[0].mxu0 %v204
    %v407 = vpop.f32.mrb[0].mxu0
    %v408 = vadd.f32 0.0, %v407
    %v409 = vpop.f32.mrb[0].mxu0
    %410 = vmatprep.mubr.f32.mxu0 0.0
    %411 = vmatmul.mubr.f32.gmra.mrb[0].mxu0 %v207
    %v412 = vpop.f32.mrb[0].mxu0
    %v413 = vadd.f32 0.0, %v412
    %v414 = vpop.f32.mrb[0].mxu0
    %415 = vmatprep.mubr.f32.mxu0 0.0
    %416 = vmatmul.mubr.f32.gmra.mrb[0].mxu0 %v210
    %v417 = vpop.f32.mrb[0].mxu0
    %v418 = vadd.f32 0.0, %v417
    %v419 = vpop.f32.mrb[0].mxu0
    %420 = vmatprep.mubr.f32.mxu0 0.0
    %421 = vmatmul.mubr.f32.gmra.mrb[0].mxu0 %v213
    %v422 = vpop.f32.mrb[0].mxu0
    %v423 = vadd.f32 0.0, %v422
    %v424 = vpop.f32.mrb[0].mxu0
    %425 = vmatprep.mubr.f32.mxu0 0.0
    %426 = vmatmul.mubr.f32.gmra.mrb[0].mxu0 %v216
    %v427 = vpop.f32.mrb[0].mxu0
    %v428 = vadd.f32 0.0, %v427
    %v429 = vpop.f32.mrb[0].mxu0
    %430 = vmatprep.mubr.f32.mxu0 0.0
    %431 = vmatmul.mubr.f32.gmra.mrb[0].mxu0 %v219
    %v432 = vpop.f32.mrb[0].mxu0
    %v433 = vadd.f32 0.0, %v432
    %v434 = vpop.f32.mrb[0].mxu0
    %435 = vmatprep.mubr.f32.mxu0 0.0
    %436 = vmatmul.mubr.f32.gmra.mrb[0].mxu0 %v222
    %v437 = vpop.f32.mrb[0].mxu0
    %v438 = vadd.f32 0.0, %v437
    %v439 = vpop.f32.mrb[0].mxu0
    %440 = vmatprep.mubr.f32.mxu0 0.0
    %441 = vmatmul.mubr.f32.gmra.mrb[0].mxu0 %v225
    %v442 = vpop.f32.mrb[0].mxu0
    %v443 = vadd.f32 0.0, %v442
    %v444 = vpop.f32.mrb[0].mxu0
    %445 = vdwg.mxu0
    %v446 = vpack.c.bf16 %v115, %v112
    %v447 = vpack.c.bf16 %v123, %v120
    %v448 = vpack.c.bf16 %v131, %v128
    %v449 = vpack.c.bf16 %v139, %v136
    %v450 = vpack.c.bf16 %v147, %v144
    %v451 = vpack.c.bf16 %v155, %v152
    %v452 = vpack.c.bf16 %v163, %v160
    %v453 = vpack.c.bf16 %v171, %v168
    %v462 = vunpack.c.l.b16 %v446
    %v463 = vunpack.c.h.b16 %v446
    %v464 = vunpack.c.l.b16 %v447
    %v465 = vunpack.c.h.b16 %v447
    %v466 = vunpack.c.l.b16 %v448
    %v467 = vunpack.c.h.b16 %v448
    %v468 = vunpack.c.l.b16 %v449
    %v469 = vunpack.c.h.b16 %v449
    %v470 = vunpack.c.l.b16 %v450
    %v471 = vunpack.c.h.b16 %v450
    %v472 = vunpack.c.l.b16 %v451
    %v473 = vunpack.c.h.b16 %v451
    %v474 = vunpack.c.l.b16 %v452
    %v475 = vunpack.c.h.b16 %v452
    %v476 = vunpack.c.l.b16 %v453
    %v477 = vunpack.c.h.b16 %v453
    %v478 = vpack.c.b16 %v462, %v462
    %v479 = vpack.c.b16 %v463, %v463
    %v480 = vpack.c.b16 %v464, %v464
    %v481 = vpack.c.b16 %v465, %v465
    %v482 = vpack.c.b16 %v466, %v466
    %v483 = vpack.c.b16 %v467, %v467
    %v484 = vpack.c.b16 %v468, %v468
    %v485 = vpack.c.b16 %v469, %v469
    %v486 = vpack.c.b16 %v470, %v470
    %v487 = vpack.c.b16 %v471, %v471
    %v488 = vpack.c.b16 %v472, %v472
    %v489 = vpack.c.b16 %v473, %v473
    %v490 = vpack.c.b16 %v474, %v474
    %v491 = vpack.c.b16 %v475, %v475
    %v492 = vpack.c.b16 %v476, %v476
    %v493 = vpack.c.b16 %v477, %v477
    %vm510 = vcmask 519168
    %511 = vst.msk [vmem:[%s4] sm:$0xf] %vm510, %v478
    %512 = vst.msk [vmem:[%s4 + $0x4] sm:$0xf] %vm510, %v479
    %513 = vst.msk [vmem:[%s4 + $0x8] sm:$0xf] %vm510, %v480
    %514 = vst.msk [vmem:[%s4 + $0xc] sm:$0xf] %vm510, %v481
    %515 = vst.msk [vmem:[%s4 + $0x10] sm:$0xf] %vm510, %v482
    %516 = vst.msk [vmem:[%s4 + $0x14] sm:$0xf] %vm510, %v483
    %517 = vst.msk [vmem:[%s4 + $0x18] sm:$0xf] %vm510, %v484
    %518 = vst.msk [vmem:[%s4 + $0x1c] sm:$0xf] %vm510, %v485
    %519 = vst.msk [vmem:[%s4 + $0x20] sm:$0xf] %vm510, %v486
    %520 = vst.msk [vmem:[%s4 + $0x24] sm:$0xf] %vm510, %v487
    %521 = vst.msk [vmem:[%s4 + $0x28] sm:$0xf] %vm510, %v488
    %522 = vst.msk [vmem:[%s4 + $0x2c] sm:$0xf] %vm510, %v489
    %523 = vst.msk [vmem:[%s4 + $0x30] sm:$0xf] %vm510, %v490
    %524 = vst.msk [vmem:[%s4 + $0x34] sm:$0xf] %vm510, %v491
    %525 = vst.msk [vmem:[%s4 + $0x38] sm:$0xf] %vm510, %v492
    %526 = vst.msk [vmem:[%s4 + $0x3c] sm:$0xf] %vm510, %v493
    %527 = vst [vmem:[#allocation2] sm:$0xf] %v294
    %vm528 = vcmask 31744
    %529 = vst.msk [vmem:[%s6] sm:$0xff] %vm528, %v368
    %530 = vst.msk [vmem:[%s6 + $0x8] sm:$0xff] %vm528, %v373
    %531 = vst.msk [vmem:[%s6 + $0x10] sm:$0xff] %vm528, %v378
    %532 = vst.msk [vmem:[%s6 + $0x18] sm:$0xff] %vm528, %v383
    %533 = vst.msk [vmem:[%s6 + $0x20] sm:$0xff] %vm528, %v388
    %534 = vst.msk [vmem:[%s6 + $0x28] sm:$0xff] %vm528, %v393
    %535 = vst.msk [vmem:[%s6 + $0x30] sm:$0xff] %vm528, %v398
    %536 = vst.msk [vmem:[%s6 + $0x38] sm:$0xff] %vm528, %v403
    %537 = vst.msk [vmem:[%s6 + $0x40] sm:$0xff] %vm528, %v408
    %538 = vst.msk [vmem:[%s6 + $0x48] sm:$0xff] %vm528, %v413
    %539 = vst.msk [vmem:[%s6 + $0x50] sm:$0xff] %vm528, %v418
    %540 = vst.msk [vmem:[%s6 + $0x58] sm:$0xff] %vm528, %v423
    %541 = vst.msk [vmem:[%s6 + $0x60] sm:$0xff] %vm528, %v428
    %542 = vst.msk [vmem:[%s6 + $0x68] sm:$0xff] %vm528, %v433
    %543 = vst.msk [vmem:[%s6 + $0x70] sm:$0xff] %vm528, %v438
    %544 = vst.msk [vmem:[%s6 + $0x78] sm:$0xff] %vm528, %v443
    // Predicated region
    $region18: #{tpu_custom_call.1} parent=1 // pred_check
      _
    $region19: #{tpu_custom_call.1} parent=1 // pred_check_branch
      %546 = sbr.rel (0) target = $region21
    $region20: #{tpu_custom_call.1} parent=1 // pred_region
      _
    $region21: #{tpu_custom_call.1} parent=1 // pred_fallthru
      _
    // Predicated region
    $region22: #{tpu_custom_call.1} parent=1 // pred_check
      _
    $region23: #{tpu_custom_call.1} parent=1 // pred_check_branch
      %548 = sbr.rel (0) target = $region25
    $region24: #{tpu_custom_call.1} parent=1 // pred_region
      %s550 = ssub.s32 64, 64
      %551 = vsyncadd [#allocation3], %s550
      %s553 = sshll.u32 [#allocation2], 4
      %s554 = int_to_ptr.vmem [resolvable:$true] %s553
      %556 = dma.vmem_to_hbm [thread:$0]  %s554, 64, %s5, [#allocation3]
    $region25: #{tpu_custom_call.1} parent=1 // pred_fallthru
      _
    // Predicated region
    $region26: #{tpu_custom_call.1} parent=1 // pred_check
      _
    $region27: #{tpu_custom_call.1} parent=1 // pred_check_branch
      %558 = sbr.rel (0) target = $region29
    $region28: #{tpu_custom_call.1} parent=1 // pred_region
      _
    $region29: #{tpu_custom_call.1} parent=1 // pred_fallthru
      _
    // Predicated region
    $region30: #{tpu_custom_call.1} parent=1 // pred_check
      _
    $region31: #{tpu_custom_call.1} parent=1 // pred_check_branch
      %560 = sbr.rel (0) target = $region33
    $region32: #{tpu_custom_call.1} parent=1 // pred_region
      _
    $region33: #{tpu_custom_call.1} parent=1 // pred_fallthru
      _
    // Predicated region
    $region34: #{tpu_custom_call.1} parent=1 // pred_check
      _
    $region35: #{tpu_custom_call.1} parent=1 // pred_check_branch
      %562 = sbr.rel (0) target = $region37
    $region36: #{tpu_custom_call.1} parent=1 // pred_region
      %563 = dma.done [#allocation3], 64
    $region37: #{tpu_custom_call.1} parent=1 // pred_fallthru
      _
    // Predicated region
    $region38: #{tpu_custom_call.1} parent=1 // pred_check
      _
    $region39: #{tpu_custom_call.1} parent=1 // pred_check_branch
      %565 = sbr.rel (0) target = $region41
    $region40: #{tpu_custom_call.1} parent=1 // pred_region
      _
    $region41: #{tpu_custom_call.1} parent=1 // pred_fallthru
      _
    %566 = vsyncpa [#allocation3], 1

</llo_original>
